<compile_context>
chip_gen: v5e
topology: v5e:2x2
jax: 0.10.0
libtpu: 0.0.40
codegen_flags: <defaults>
</compile_context>

<pallas_src>
import math

import jax
import jax.numpy as jnp
from jax.experimental import pallas as pl
from jax.experimental.pallas import tpu as pltpu


def _round_up(x, m):
    return ((x + m - 1) // m) * m


def _pick_tile(total, target):
    """Largest multiple of 128 that divides `total` (a multiple of 128) and is
    <= max(target, 128)."""
    units = total // 128
    tgt = max(1, min(units, target // 128))
    for t in range(tgt, 0, -1):
        if units % t == 0:
            return t * 128
    return 128


def _next_smaller_tile(total, tile):
    if tile <= 128:
        return 128
    return _pick_tile(total, tile - 128)


# ---------------- stage 1: support = x @ W (computed exactly once) ----------
def _support_kernel(x_ref, w_ref, s_ref):
    s_ref[...] = jnp.dot(
        x_ref[...], w_ref[...], preferred_element_type=jnp.float32
    ).astype(s_ref.dtype)


# ---------------- stage 2 kernels: out = adj @ support (+ bias) -------------
def _make_resident_kernel(has_bias):
    """Support fully VMEM-resident: one dot per row tile, no K axis/scratch."""

    def kernel(*refs):
        if has_bias:
            adj_ref, s_ref, b_ref, o_ref = refs
        else:
            adj_ref, s_ref, o_ref = refs
        acc = jnp.dot(adj_ref[...], s_ref[...], preferred_element_type=jnp.float32)
        if has_bias:
            acc = acc + b_ref[...].astype(jnp.float32)
        o_ref[...] = acc.astype(o_ref.dtype)

    return kernel


def _make_tiled_kernel(has_bias, acc_in_out):
    """K-tiled adj @ support with f32 accumulation.

    acc_in_out: output dtype is f32 and the output tile is resident across the
    k axis, so accumulate directly into o_ref (no scratch, no epilogue copy).
    Otherwise accumulate in an f32 VMEM scratch and cast on the last k step.
    """

    def kernel(*refs):
        if acc_in_out:
            if has_bias:
                adj_ref, s_ref, b_ref, o_ref = refs
            else:
                adj_ref, s_ref, o_ref = refs
            acc_ref = o_ref
        else:
            if has_bias:
                adj_ref, s_ref, b_ref, o_ref, acc_ref = refs
            else:
                adj_ref, s_ref, o_ref, acc_ref = refs

        k = pl.program_id(1)

        @pl.when(k == 0)
        def _():
            acc_ref[...] = jnp.zeros_like(acc_ref)

        acc_ref[...] += jnp.dot(
            adj_ref[...], s_ref[...], preferred_element_type=jnp.float32
        )

        if has_bias or not acc_in_out:

            @pl.when(k == pl.num_programs(1) - 1)
            def _():
                res = acc_ref[...]
                if has_bias:
                    res = res + b_ref[...].astype(jnp.float32)
                o_ref[...] = res.astype(o_ref.dtype)

    return kernel


def graph_convolution(
    x,
    adj,
    weight,
    bias=None,
    *,
    tile_m=512,                    # output-row tile target (stage 2)
    tile_k=2048,                   # contraction tile target over nodes (stage 2)
    tile_n=1024,                   # row tile target for x @ W (stage 1)
    compute_dtype=None,            # None: stream inputs as-is (no wrapper cast)
    support_dtype=jnp.float32,     # support kept f32 by default (small traffic)
    vmem_budget_bytes=32 << 20,    # VMEM budget used for tile sizing
    use_resident_support=None,     # None: auto; True/False: force path
):
    """x: [N, F_in], adj: [N, N], weight: [F_in, F_out], bias: [F_out] or None."""
    N, F_in = x.shape
    assert weight.shape[0] == F_in
    F_out = weight.shape[1]
    assert adj.shape == (N, N)

    out_dtype = jnp.result_type(x.dtype, adj.dtype, weight.dtype)

    x_c, adj_c, w_c = x, adj, weight
    if compute_dtype is not None:
        # NOTE: for reuse across GCN layers / training steps, cast adj once
        # upstream instead of paying this O(N^2) cast pass per call.
        x_c = x_c.astype(compute_dtype)
        adj_c = adj_c.astype(compute_dtype)
        w_c = w_c.astype(compute_dtype)

    Np = _round_up(N, 128)
    F_out_p = _round_up(F_out, 128)
    sup_dtype = support_dtype if support_dtype is not None else adj_c.dtype

    if Np != N:
        x_c = jnp.pad(x_c, ((0, Np - N), (0, 0)))
        adj_c = jnp.pad(adj_c, ((0, Np - N), (0, Np - N)))
    if F_out_p != F_out:
        w_c = jnp.pad(w_c, ((0, 0), (0, F_out_p - F_out)))

    x_b = jnp.dtype(x_c.dtype).itemsize
    w_b = jnp.dtype(w_c.dtype).itemsize
    adj_b = jnp.dtype(adj_c.dtype).itemsize
    sup_b = jnp.dtype(sup_dtype).itemsize
    out_b = jnp.dtype(out_dtype).itemsize
    bias_bytes = (2 * F_out_p * 4) if bias is not None else 0

    # ---- stage 1: support = x @ W -------------------------------------------
    tile_n_eff = _pick_tile(Np, tile_n)
    # v7x guard: tile F_out when the full weight would crowd VMEM.
    tf_target = max(128, ((8 << 20) // max(1, F_in * w_b)) // 128 * 128)
    tile_f = _pick_tile(F_out_p, min(F_out_p, tf_target))

    def stage1_vmem(tn, tf):
        return 2 * (tn * F_in * x_b + F_in * tf * w_b + tn * tf * sup_b)

    while tile_n_eff > 128 and stage1_vmem(tile_n_eff, tile_f) > vmem_budget_bytes:
        tile_n_eff = _next_smaller_tile(Np, tile_n_eff)
    while tile_f > 128 and stage1_vmem(tile_n_eff, tile_f) > vmem_budget_bytes:
        tile_f = _next_smaller_tile(F_out_p, tile_f)

    s1_limit = int(
        min(64 << 20, max(32 << 20, 1.3 * stage1_vmem(tile_n_eff, tile_f) + (2 << 20)))
    )

    support = pl.pallas_call(
        _support_kernel,
        out_shape=jax.ShapeDtypeStruct((Np, F_out_p), sup_dtype),
        grid_spec=pltpu.PrefetchScalarGridSpec(
            num_scalar_prefetch=0,
            grid=(Np // tile_n_eff, F_out_p // tile_f),
            in_specs=[
                pl.BlockSpec((tile_n_eff, F_in), lambda i, j: (i, 0)),   # x row tile
                pl.BlockSpec((F_in, tile_f), lambda i, j: (0, j)),       # weight tile
            ],
            out_specs=pl.BlockSpec((tile_n_eff, tile_f), lambda i, j: (i, j)),
        ),
        compiler_params=pltpu.CompilerParams(
            dimension_semantics=("parallel", "parallel"),
            vmem_limit_bytes=s1_limit,
        ),
    )(x_c, w_c)
    # TODO(synk): for tiny graphs fold stage 1 into stage 2 (single pallas_call)
    # to save the second kernel launch/prologue.

    # ---- stage 2: out = adj @ support (+ bias) -------------------------------
    tm_target = tile_m
    if Np >= 256:
        tm_target = min(tm_target, Np // 2)   # keep >= 2 row tiles for megacore
    tile_m_eff = _pick_tile(Np, tm_target)

    def resident_vmem(tm):
        return (2 * tm * Np * adj_b + 2 * Np * F_out_p * sup_b
                + 2 * tm * F_out_p * out_b + bias_bytes)

    if use_resident_support is None:
        resident = resident_vmem(tile_m_eff) <= vmem_budget_bytes
        if not resident:
            tm_try = tile_m_eff
            while tm_try > 128 and resident_vmem(tm_try) > vmem_budget_bytes:
                tm_try = _next_smaller_tile(Np, tm_try)
            if resident_vmem(tm_try) <= vmem_budget_bytes:
                resident, tile_m_eff = True, tm_try
    else:
        resident = bool(use_resident_support)

    has_bias = bias is not None
    if has_bias:
        b2d = bias.reshape(1, F_out).astype(jnp.float32)
        if F_out_p != F_out:
            b2d = jnp.pad(b2d, ((0, 0), (0, F_out_p - F_out)))

    if resident:
        while tile_m_eff > 128 and resident_vmem(tile_m_eff) > vmem_budget_bytes:
            tile_m_eff = _next_smaller_tile(Np, tile_m_eff)
        est = resident_vmem(tile_m_eff)
        in_specs = [
            pl.BlockSpec((tile_m_eff, Np), lambda i: (i, 0)),       # adj row stripe
            pl.BlockSpec((Np, F_out_p), lambda i: (0, 0)),          # resident support
        ]
        args = [adj_c, support]
        if has_bias:
            in_specs.append(pl.BlockSpec((1, F_out_p), lambda i: (0, 0)))
            args.append(b2d)
        kernel = _make_resident_kernel(has_bias)
        grid = (Np // tile_m_eff,)
        out_specs = pl.BlockSpec((tile_m_eff, F_out_p), lambda i: (i, 0))
        scratch_shapes = []
        dim_sem = ("parallel",)
    else:
        acc_in_out = out_dtype == jnp.float32
        tile_k_eff = _pick_tile(Np, tile_k)

        def tiled_vmem(tm, tk):
            v = (2 * tm * tk * adj_b + 2 * tk * F_out_p * sup_b
                 + 2 * tm * F_out_p * out_b + bias_bytes)
            if not acc_in_out:
                v += tm * F_out_p * 4
            return v

        while tile_k_eff > 128 and tiled_vmem(tile_m_eff, tile_k_eff) > vmem_budget_bytes:
            tile_k_eff = _next_smaller_tile(Np, tile_k_eff)
        while tile_m_eff > 128 and tiled_vmem(tile_m_eff, tile_k_eff) > vmem_budget_bytes:
            tile_m_eff = _next_smaller_tile(Np, tile_m_eff)
        est = tiled_vmem(tile_m_eff, tile_k_eff)

        # TODO(synk): middle path (resident support + K-tiled adj via in-kernel
        # pl.ds) would drop support re-reads when support fits but the adj row
        # stripe does not; sweep pipeline_mode=pl.Buffered(3) for small tiles.
        in_specs = [
            pl.BlockSpec((tile_m_eff, tile_k_eff), lambda i, k: (i, k)),   # adj tile
            pl.BlockSpec((tile_k_eff, F_out_p), lambda i, k: (k, 0)),      # support
        ]
        args = [adj_c, support]
        if has_bias:
            in_specs.append(pl.BlockSpec((1, F_out_p), lambda i, k: (0, 0)))
            args.append(b2d)
        kernel = _make_tiled_kernel(has_bias, acc_in_out)
        grid = (Np // tile_m_eff, Np // tile_k_eff)
        out_specs = pl.BlockSpec((tile_m_eff, F_out_p), lambda i, k: (i, 0))
        scratch_shapes = (
            [] if acc_in_out else [pltpu.VMEM((tile_m_eff, F_out_p), jnp.float32)]
        )
        dim_sem = ("parallel", "arbitrary")

    s2_limit = int(min(64 << 20, max(32 << 20, 1.3 * est + (2 << 20))))

    out = pl.pallas_call(
        kernel,
        out_shape=jax.ShapeDtypeStruct((Np, F_out_p), out_dtype),
        grid_spec=pltpu.PrefetchScalarGridSpec(
            num_scalar_prefetch=0,
            grid=grid,
            in_specs=in_specs,
            out_specs=out_specs,
            scratch_shapes=scratch_shapes,
        ),
        compiler_params=pltpu.CompilerParams(
            dimension_semantics=dim_sem,
            vmem_limit_bytes=s2_limit,
        ),
    )(*args)

    if Np != N or F_out_p != F_out:
        out = out[:N, :F_out]
    return out


if __name__ == "__main__":
    # Small, TPU-tile-friendly shapes.
    N = 256        # number of graph nodes
    F_in = 64      # in_features
    F_out = 128    # out_features

    key = jax.random.PRNGKey(0)
    kx, kadj, kw, kb = jax.random.split(key, 4)

    # Deterministic init mirroring reset_parameters(): uniform(-stdv, stdv),
    # stdv = 1/sqrt(out_features).
    stdv = 1.0 / math.sqrt(F_out)
    weight = jax.random.uniform(kw, (F_in, F_out), jnp.float32, -stdv, stdv)
    bias = jax.random.uniform(kb, (F_out,), jnp.float32, -stdv, stdv)

    x = jax.random.normal(kx, (N, F_in), jnp.float32)
    adj_raw = jax.random.uniform(kadj, (N, N), jnp.float32)
    adj = adj_raw / jnp.sum(adj_raw, axis=-1, keepdims=True)  # row-normalize

    ref = adj @ (x @ weight) + bias

    # 1. Default f32 path (resident-support fast path, no wrapper casts).
    out = jax.block_until_ready(graph_convolution(x, adj, weight, bias))
    assert out.shape == (N, F_out)
    assert jnp.allclose(out, ref, atol=5e-4, rtol=5e-4), "f32 resident path mismatch"

    # 2. bf16-streamed adj/x/W (halved bytes on the dominant adj stream),
    #    support + accumulation stay f32.
    out_bf16 = jax.block_until_ready(
        graph_convolution(x, adj, weight, bias, compute_dtype=jnp.bfloat16)
    )
    assert jnp.allclose(out_bf16, ref, atol=3e-2, rtol=3e-2), "bf16 path mismatch"

    # 3. Forced K-tiled path, f32 output -> accumulate directly into o_ref.
    out_kt = jax.block_until_ready(
        graph_convolution(x, adj, weight, bias,
                          use_resident_support=False, tile_m=128, tile_k=128)
    )
    assert jnp.allclose(out_kt, ref, atol=5e-4, rtol=5e-4), "k-tiled f32 path mismatch"

    # 4. Forced K-tiled path, bf16 output -> f32 VMEM scratch + epilogue cast.
    xb, adjb, wb, bb = (a.astype(jnp.bfloat16) for a in (x, adj, weight, bias))
    out_kt_bf = jax.block_until_ready(
        graph_convolution(xb, adjb, wb, bb,
                          use_resident_support=False, tile_m=128, tile_k=128)
    )
    assert out_kt_bf.dtype == jnp.bfloat16
    assert jnp.allclose(out_kt_bf.astype(jnp.float32), ref, atol=5e-2, rtol=5e-2), \
        "k-tiled bf16 path mismatch"

    # 5. bias=None path (no bias stream added at all).
    ref_nb = adj @ (x @ weight)
    out_nb = jax.block_until_ready(graph_convolution(x, adj, weight, None))
    assert jnp.allclose(out_nb, ref_nb, atol=5e-4, rtol=5e-4), "no-bias mismatch"

    # 6. Ragged N (not a multiple of 128): padded to 128 only (no lcm padding).
    N2 = 200
    x2 = x[:N2]
    adj2 = adj_raw[:N2, :N2]
    adj2 = adj2 / jnp.sum(adj2, axis=-1, keepdims=True)
    ref2 = adj2 @ (x2 @ weight) + bias
    out2 = jax.block_until_ready(graph_convolution(x2, adj2, weight, bias))
    assert out2.shape == (N2, F_out)
    assert jnp.allclose(out2, ref2, atol=5e-4, rtol=5e-4), "padded-N mismatch"

    print("KERNEL_OK")
</pallas_src>

<mosaic_0001>
module attributes {stable_mosaic.version = 11 : i64} {
  func.func @_support_kernel(%arg0: i32, %arg1: i32, %arg2: memref<256x64xf32, #tpu.memory_space<vmem>>, %arg3: memref<64x128xf32, #tpu.memory_space<vmem>>, %arg4: memref<256x128xf32, #tpu.memory_space<vmem>>) attributes {dimension_semantics = [#tpu.dimension_semantics<parallel>, #tpu.dimension_semantics<parallel>], iteration_bounds = array<i64: 1, 1>, scalar_prefetch = 0 : i64, scratch_operands = 0 : i64, tpu.core_type = #tpu.core_type<tc>, window_params = [{transform_indices = @transform_0, window_bounds = array<i64: 256, 64>}, {transform_indices = @transform_1, window_bounds = array<i64: 64, 128>}, {transform_indices = @transform_2, window_bounds = array<i64: 256, 128>}]} {
    %c0 = arith.constant 0 : index
    %c0_0 = arith.constant 0 : index
    %0 = vector.load %arg2[%c0, %c0_0] : memref<256x64xf32, #tpu.memory_space<vmem>>, vector<256x64xf32>
    %c0_1 = arith.constant 0 : index
    %c0_2 = arith.constant 0 : index
    %1 = vector.load %arg3[%c0_1, %c0_2] : memref<64x128xf32, #tpu.memory_space<vmem>>, vector<64x128xf32>
    %cst = arith.constant dense<0.000000e+00> : vector<256x128xf32>
    %2 = tpu.matmul %0, %1, %cst {dimension_numbers = #tpu.dot_dimension_numbers<[1], [0], [0], [1], [0, 0, 1, 1], [], []>} : vector<256x64xf32>, vector<64x128xf32>, vector<256x128xf32> -> vector<256x128xf32>
    %c0_3 = arith.constant 0 : index
    %c0_4 = arith.constant 0 : index
    %3 = vector.load %arg4[%c0_3, %c0_4] : memref<256x128xf32, #tpu.memory_space<vmem>>, vector<256x128xf32>
    tpu.vector_store %arg4[%c0_3, %c0_4], %2 {strides = array<i32>} : memref<256x128xf32, #tpu.memory_space<vmem>>, vector<256x128xf32>,
    return
  }
  func.func @transform_0(%arg0: i32, %arg1: i32) -> (i32, i32) {
    %c0_i32 = arith.constant 0 : i32
    %c0_i32_0 = arith.constant 0 : i32
    return %arg0, %c0_i32 : i32, i32
  }
  func.func @transform_1(%arg0: i32, %arg1: i32) -> (i32, i32) {
    %c0_i32 = arith.constant 0 : i32
    %c0_i32_0 = arith.constant 0 : i32
    return %c0_i32, %arg1 : i32, i32
  }
  func.func @transform_2(%arg0: i32, %arg1: i32) -> (i32, i32) {
    %c0_i32 = arith.constant 0 : i32
    return %arg0, %arg1 : i32, i32
  }
}

</mosaic_0001>

<llo_original>
// kernel: tpu_custom_call.1
$region0: #{tpu_custom_call.1}
  #allocation0 [shape = 'u32[]', space=smem, size = 0x4, offset = 0x4, fixed_abs, tag = 'smem constant byte address 0x4 - core index']
  #allocation1 [shape = 'u32[72,128]{1,0:T(1,128)}', space=vmem, size = 0x9000, scoped, tag = 'internal scratch']
  %s0 = inlined_call_operand.vmem [shape: f32[256,64], index: 0, kind: input, shape index: {}]
  %s1 = inlined_call_operand.vmem [shape: f32[64,128], index: 1, kind: input, shape index: {}]
  %s2 = inlined_call_operand.hbm [shape: f32[256,128], index: 2, kind: output, shape index: {}]
  %s3 = sld [smem:[#allocation0]]
  $region18: #{tpu_custom_call.1} parent=0
    _
  %s5 = ssub.s32 1, %s3
  %s6 = scalar_select 0, %s5, %s3
  $region1: #{tpu_custom_call.1} parent=0
    #allocation2 [shape = 'u8[131072]{0}', space=vmem, size = 0x20000, scoped, tag = 'output window, operand 0, single buffered']
    #allocation3 [shape = 's32[1]{0}', space=sflag, size = 0x4, scoped, tag = 'scoped memory for tpu_custom_call.1']
    %7 = vsyncpa [#allocation3], 0
    // Predicated region
    $region2: #{tpu_custom_call.1} parent=1 // pred_check
      _
    $region3: #{tpu_custom_call.1} parent=1 // pred_check_branch
      %9 = sbr.rel (0) target = $region5
    $region4: #{tpu_custom_call.1} parent=1 // pred_region
      _
    $region5: #{tpu_custom_call.1} parent=1 // pred_fallthru
      _
    // Predicated region
    $region6: #{tpu_custom_call.1} parent=1 // pred_check
      _
    $region7: #{tpu_custom_call.1} parent=1 // pred_check_branch
      %11 = sbr.rel (0) target = $region9
    $region8: #{tpu_custom_call.1} parent=1 // pred_region
      _
    $region9: #{tpu_custom_call.1} parent=1 // pred_fallthru
      _
    %v12 = vld [vmem:[%s0] sm:$0xff]
    %v13 = vld [vmem:[%s0 + $0x8] sm:$0xff]
    %v14 = vld [vmem:[%s0 + $0x10] sm:$0xff]
    %v15 = vld [vmem:[%s0 + $0x18] sm:$0xff]
    %v16 = vld [vmem:[%s0 + $0x20] sm:$0xff]
    %v17 = vld [vmem:[%s0 + $0x28] sm:$0xff]
    %v18 = vld [vmem:[%s0 + $0x30] sm:$0xff]
    %v19 = vld [vmem:[%s0 + $0x38] sm:$0xff]
    %v20 = vld [vmem:[%s0 + $0x40] sm:$0xff]
    %v21 = vld [vmem:[%s0 + $0x48] sm:$0xff]
    %v22 = vld [vmem:[%s0 + $0x50] sm:$0xff]
    %v23 = vld [vmem:[%s0 + $0x58] sm:$0xff]
    %v24 = vld [vmem:[%s0 + $0x60] sm:$0xff]
    %v25 = vld [vmem:[%s0 + $0x68] sm:$0xff]
    %v26 = vld [vmem:[%s0 + $0x70] sm:$0xff]
    %v27 = vld [vmem:[%s0 + $0x78] sm:$0xff]
    %v28 = vld [vmem:[%s0 + $0x80] sm:$0xff]
    %v29 = vld [vmem:[%s0 + $0x88] sm:$0xff]
    %v30 = vld [vmem:[%s0 + $0x90] sm:$0xff]
    %v31 = vld [vmem:[%s0 + $0x98] sm:$0xff]
    %v32 = vld [vmem:[%s0 + $0xa0] sm:$0xff]
    %v33 = vld [vmem:[%s0 + $0xa8] sm:$0xff]
    %v34 = vld [vmem:[%s0 + $0xb0] sm:$0xff]
    %v35 = vld [vmem:[%s0 + $0xb8] sm:$0xff]
    %v36 = vld [vmem:[%s0 + $0xc0] sm:$0xff]
    %v37 = vld [vmem:[%s0 + $0xc8] sm:$0xff]
    %v38 = vld [vmem:[%s0 + $0xd0] sm:$0xff]
    %v39 = vld [vmem:[%s0 + $0xd8] sm:$0xff]
    %v40 = vld [vmem:[%s0 + $0xe0] sm:$0xff]
    %v41 = vld [vmem:[%s0 + $0xe8] sm:$0xff]
    %v42 = vld [vmem:[%s0 + $0xf0] sm:$0xff]
    %v43 = vld [vmem:[%s0 + $0xf8] sm:$0xff]
    %v44 = vld [vmem:[%s1] sm:$0xff]
    %v45 = vld [vmem:[%s1 + $0x8] sm:$0xff]
    %v46 = vld [vmem:[%s1 + $0x10] sm:$0xff]
    %v47 = vld [vmem:[%s1 + $0x18] sm:$0xff]
    %v48 = vld [vmem:[%s1 + $0x20] sm:$0xff]
    %v49 = vld [vmem:[%s1 + $0x28] sm:$0xff]
    %v50 = vld [vmem:[%s1 + $0x30] sm:$0xff]
    %v51 = vld [vmem:[%s1 + $0x38] sm:$0xff]
    %vm52 = vcmask 523264
    %v54 = vsel %vm52, %v12, 0
    %v57 = vsel %vm52, %v13, 0
    %v60 = vsel %vm52, %v14, 0
    %v63 = vsel %vm52, %v15, 0
    %v66 = vsel %vm52, %v16, 0
    %v69 = vsel %vm52, %v17, 0
    %v72 = vsel %vm52, %v18, 0
    %v75 = vsel %vm52, %v19, 0
    %v78 = vsel %vm52, %v20, 0
    %v81 = vsel %vm52, %v21, 0
    %v84 = vsel %vm52, %v22, 0
    %v87 = vsel %vm52, %v23, 0
    %v90 = vsel %vm52, %v24, 0
    %v93 = vsel %vm52, %v25, 0
    %v96 = vsel %vm52, %v26, 0
    %v99 = vsel %vm52, %v27, 0
    %v102 = vsel %vm52, %v28, 0
    %v105 = vsel %vm52, %v29, 0
    %v108 = vsel %vm52, %v30, 0
    %v111 = vsel %vm52, %v31, 0
    %v114 = vsel %vm52, %v32, 0
    %v117 = vsel %vm52, %v33, 0
    %v120 = vsel %vm52, %v34, 0
    %v123 = vsel %vm52, %v35, 0
    %v126 = vsel %vm52, %v36, 0
    %v129 = vsel %vm52, %v37, 0
    %v132 = vsel %vm52, %v38, 0
    %v135 = vsel %vm52, %v39, 0
    %v138 = vsel %vm52, %v40, 0
    %v141 = vsel %vm52, %v41, 0
    %v144 = vsel %vm52, %v42, 0
    %v147 = vsel %vm52, %v43, 0
    %149 = vmatpush.msra.mxu0 0.0
    %150 = vmatpush.msra.mxu0 0.0
    %151 = vmatpush.msra.mxu0 0.0
    %152 = vmatpush.msra.mxu0 0.0
    %153 = vmatpush.msra.mxu0 0.0
    %154 = vmatpush.msra.mxu0 0.0
    %155 = vmatpush.msra.mxu0 0.0
    %156 = vmatpush.msra.mxu0 0.0
    %157 = vmatpush.msra.mxu0 %v51
    %158 = vmatpush.msra.mxu0 %v50
    %159 = vmatpush.msra.mxu0 %v49
    %160 = vmatpush.msra.mxu0 %v48
    %161 = vmatpush.msra.mxu0 %v47
    %162 = vmatpush.msra.mxu0 %v46
    %163 = vmatpush.msra.mxu0 %v45
    %164 = vmatpush.msra.mxu0 %v44
    %165 = vmatmul.f32.gmra.mxu0 %v54
    %v166 = vpop.f32.mrf.mxu0
    %v167 = vadd.f32 0.0, %v166
    %168 = vmatmul.f32.gmra.mxu0 %v57
    %v169 = vpop.f32.mrf.mxu0
    %v170 = vadd.f32 0.0, %v169
    %171 = vmatmul.f32.gmra.mxu0 %v60
    %v172 = vpop.f32.mrf.mxu0
    %v173 = vadd.f32 0.0, %v172
    %174 = vmatmul.f32.gmra.mxu0 %v63
    %v175 = vpop.f32.mrf.mxu0
    %v176 = vadd.f32 0.0, %v175
    %177 = vmatmul.f32.gmra.mxu0 %v66
    %v178 = vpop.f32.mrf.mxu0
    %v179 = vadd.f32 0.0, %v178
    %180 = vmatmul.f32.gmra.mxu0 %v69
    %v181 = vpop.f32.mrf.mxu0
    %v182 = vadd.f32 0.0, %v181
    %183 = vmatmul.f32.gmra.mxu0 %v72
    %v184 = vpop.f32.mrf.mxu0
    %v185 = vadd.f32 0.0, %v184
    %186 = vmatmul.f32.gmra.mxu0 %v75
    %v187 = vpop.f32.mrf.mxu0
    %v188 = vadd.f32 0.0, %v187
    %189 = vmatmul.f32.gmra.mxu0 %v78
    %v190 = vpop.f32.mrf.mxu0
    %v191 = vadd.f32 0.0, %v190
    %192 = vmatmul.f32.gmra.mxu0 %v81
    %v193 = vpop.f32.mrf.mxu0
    %v194 = vadd.f32 0.0, %v193
    %195 = vmatmul.f32.gmra.mxu0 %v84
    %v196 = vpop.f32.mrf.mxu0
    %v197 = vadd.f32 0.0, %v196
    %198 = vmatmul.f32.gmra.mxu0 %v87
    %v199 = vpop.f32.mrf.mxu0
    %v200 = vadd.f32 0.0, %v199
    %201 = vmatmul.f32.gmra.mxu0 %v90
    %v202 = vpop.f32.mrf.mxu0
    %v203 = vadd.f32 0.0, %v202
    %204 = vmatmul.f32.gmra.mxu0 %v93
    %v205 = vpop.f32.mrf.mxu0
    %v206 = vadd.f32 0.0, %v205
    %207 = vmatmul.f32.gmra.mxu0 %v96
    %v208 = vpop.f32.mrf.mxu0
    %v209 = vadd.f32 0.0, %v208
    %210 = vmatmul.f32.gmra.mxu0 %v99
    %v211 = vpop.f32.mrf.mxu0
    %v212 = vadd.f32 0.0, %v211
    %213 = vmatmul.f32.gmra.mxu0 %v102
    %v214 = vpop.f32.mrf.mxu0
    %v215 = vadd.f32 0.0, %v214
    %216 = vmatmul.f32.gmra.mxu0 %v105
    %v217 = vpop.f32.mrf.mxu0
    %v218 = vadd.f32 0.0, %v217
    %219 = vmatmul.f32.gmra.mxu0 %v108
    %v220 = vpop.f32.mrf.mxu0
    %v221 = vadd.f32 0.0, %v220
    %222 = vmatmul.f32.gmra.mxu0 %v111
    %v223 = vpop.f32.mrf.mxu0
    %v224 = vadd.f32 0.0, %v223
    %225 = vmatmul.f32.gmra.mxu0 %v114
    %v226 = vpop.f32.mrf.mxu0
    %v227 = vadd.f32 0.0, %v226
    %228 = vmatmul.f32.gmra.mxu0 %v117
    %v229 = vpop.f32.mrf.mxu0
    %v230 = vadd.f32 0.0, %v229
    %231 = vmatmul.f32.gmra.mxu0 %v120
    %v232 = vpop.f32.mrf.mxu0
    %v233 = vadd.f32 0.0, %v232
    %234 = vmatmul.f32.gmra.mxu0 %v123
    %v235 = vpop.f32.mrf.mxu0
    %v236 = vadd.f32 0.0, %v235
    %237 = vmatmul.f32.gmra.mxu0 %v126
    %v238 = vpop.f32.mrf.mxu0
    %v239 = vadd.f32 0.0, %v238
    %240 = vmatmul.f32.gmra.mxu0 %v129
    %v241 = vpop.f32.mrf.mxu0
    %v242 = vadd.f32 0.0, %v241
    %243 = vmatmul.f32.gmra.mxu0 %v132
    %v244 = vpop.f32.mrf.mxu0
    %v245 = vadd.f32 0.0, %v244
    %246 = vmatmul.f32.gmra.mxu0 %v135
    %v247 = vpop.f32.mrf.mxu0
    %v248 = vadd.f32 0.0, %v247
    %249 = vmatmul.f32.gmra.mxu0 %v138
    %v250 = vpop.f32.mrf.mxu0
    %v251 = vadd.f32 0.0, %v250
    %252 = vmatmul.f32.gmra.mxu0 %v141
    %v253 = vpop.f32.mrf.mxu0
    %v254 = vadd.f32 0.0, %v253
    %255 = vmatmul.f32.gmra.mxu0 %v144
    %v256 = vpop.f32.mrf.mxu0
    %v257 = vadd.f32 0.0, %v256
    %258 = vmatmul.f32.gmra.mxu0 %v147
    %v259 = vpop.f32.mrf.mxu0
    %v260 = vadd.f32 0.0, %v259
    %261 = vdwg.mxu0
    %262 = vst [vmem:[#allocation2] sm:$0xff] %v167
    %263 = vst [vmem:[#allocation2 + $0x8] sm:$0xff] %v170
    %264 = vst [vmem:[#allocation2 + $0x10] sm:$0xff] %v173
    %265 = vst [vmem:[#allocation2 + $0x18] sm:$0xff] %v176
    %266 = vst [vmem:[#allocation2 + $0x20] sm:$0xff] %v179
    %267 = vst [vmem:[#allocation2 + $0x28] sm:$0xff] %v182
    %268 = vst [vmem:[#allocation2 + $0x30] sm:$0xff] %v185
    %269 = vst [vmem:[#allocation2 + $0x38] sm:$0xff] %v188
    %270 = vst [vmem:[#allocation2 + $0x40] sm:$0xff] %v191
    %271 = vst [vmem:[#allocation2 + $0x48] sm:$0xff] %v194
    %272 = vst [vmem:[#allocation2 + $0x50] sm:$0xff] %v197
    %273 = vst [vmem:[#allocation2 + $0x58] sm:$0xff] %v200
    %274 = vst [vmem:[#allocation2 + $0x60] sm:$0xff] %v203
    %275 = vst [vmem:[#allocation2 + $0x68] sm:$0xff] %v206
    %276 = vst [vmem:[#allocation2 + $0x70] sm:$0xff] %v209
    %277 = vst [vmem:[#allocation2 + $0x78] sm:$0xff] %v212
    %278 = vst [vmem:[#allocation2 + $0x80] sm:$0xff] %v215
    %279 = vst [vmem:[#allocation2 + $0x88] sm:$0xff] %v218
    %280 = vst [vmem:[#allocation2 + $0x90] sm:$0xff] %v221
    %281 = vst [vmem:[#allocation2 + $0x98] sm:$0xff] %v224
    %282 = vst [vmem:[#allocation2 + $0xa0] sm:$0xff] %v227
    %283 = vst [vmem:[#allocation2 + $0xa8] sm:$0xff] %v230
    %284 = vst [vmem:[#allocation2 + $0xb0] sm:$0xff] %v233
    %285 = vst [vmem:[#allocation2 + $0xb8] sm:$0xff] %v236
    %286 = vst [vmem:[#allocation2 + $0xc0] sm:$0xff] %v239
    %287 = vst [vmem:[#allocation2 + $0xc8] sm:$0xff] %v242
    %288 = vst [vmem:[#allocation2 + $0xd0] sm:$0xff] %v245
    %289 = vst [vmem:[#allocation2 + $0xd8] sm:$0xff] %v248
    %290 = vst [vmem:[#allocation2 + $0xe0] sm:$0xff] %v251
    %291 = vst [vmem:[#allocation2 + $0xe8] sm:$0xff] %v254
    %292 = vst [vmem:[#allocation2 + $0xf0] sm:$0xff] %v257
    %293 = vst [vmem:[#allocation2 + $0xf8] sm:$0xff] %v260
    // Predicated region
    $region10: #{tpu_custom_call.1} parent=1 // pred_check
      _
    $region11: #{tpu_custom_call.1} parent=1 // pred_check_branch
      %295 = sbr.rel (0) target = $region13
    $region12: #{tpu_custom_call.1} parent=1 // pred_region
      %297 = vsyncadd [#allocation3], 0
      %s298 = sshll.u32 [#allocation2], 4
      %s299 = int_to_ptr.vmem [resolvable:$true] %s298
      %s300 = sshll.u32 %s2, 4
      %s301 = int_to_ptr.hbm [resolvable:$true] %s300
      %306 = dma.vmem_to_hbm [thread:$0]  %s299, 4096, %s301, [#allocation3], 128, 128, 8
    $region13: #{tpu_custom_call.1} parent=1 // pred_fallthru
      _
    // Predicated region
    $region14: #{tpu_custom_call.1} parent=1 // pred_check
      _
    $region15: #{tpu_custom_call.1} parent=1 // pred_check_branch
      %308 = sbr.rel (0) target = $region17
    $region16: #{tpu_custom_call.1} parent=1 // pred_region
      %310 = dma.done [#allocation3], 4096
    $region17: #{tpu_custom_call.1} parent=1 // pred_fallthru
      _
    %311 = vsyncpa [#allocation3], 1

</llo_original>
